<compile_context>
chip_gen: v5e
topology: v5e:2x2
jax: 0.10.0
libtpu: 0.0.40
codegen_flags: <defaults>
</compile_context>

<pallas_src>
import jax
import jax.numpy as jnp
from jax import lax
from jax.experimental import pallas as pl
from jax.experimental.pallas import tpu as pltpu


def _bilstm_head_kernel(tok_ref,                         # (BB, T) int32 tokens
                        wih_f_ref, whh_f_ref, b_f_ref,   # forward-direction params
                        wih_r_ref, b_r_ref,              # reverse-direction params
                        wlin_ref, blin_ref,              # final linear
                        out_ref):                        # (BB, C) f32
    BB = tok_ref.shape[0]
    T = tok_ref.shape[1]
    H = whh_f_ref.shape[0]

    # token -> float conversion happens in-kernel (no wrapper-side XLA op).
    xf = tok_ref[...].astype(jnp.float32)                # (BB, T)

    wih_f = wih_f_ref[...]                               # (1, 4H)
    b_f = b_f_ref[...]                                   # (1, 4H)
    whh_f = whh_f_ref[...]                               # (H, 4H)

    # Per-step input projection + bias.  Each term is a (BB,1)x(1,4H) broadcast;
    # all T of them are independent of the recurrence, so in the fully-unrolled
    # basic block the scheduler computes them under the MXU latency.
    xw = [xf[:, t:t + 1] * wih_f + b_f for t in range(T)]   # T x (BB, 4H)

    h_f = jnp.zeros((BB, H), jnp.float32)
    c_f = jnp.zeros((BB, H), jnp.float32)

    # ---- forward LSTM recurrence, fully unrolled (T is small & static) ----
    for t in range(T):
        gates = xw[t] + jnp.dot(h_f, whh_f, preferred_element_type=jnp.float32)
        sg = jax.nn.sigmoid(gates)                       # one full-vreg EUP pass
        th = jnp.tanh(gates)                             # one full-vreg EUP pass
        i = sg[:, 0 * H:1 * H]
        f = sg[:, 1 * H:2 * H]
        g = th[:, 2 * H:3 * H]
        o = sg[:, 3 * H:4 * H]
        c_f = f * c_f + i * g
        h_f = o * jnp.tanh(c_f)

    # ---- reverse direction: output[:, -1, H:] is the reverse cell's hidden
    #      right after its FIRST step (input x[:, T-1], zero initial state), so
    #      a single elementwise cell evaluation suffices (h_prev = c_prev = 0
    #      kills the recurrent matmul and the forget-gate contribution). ----
    gates_r = xf[:, T - 1:T] * wih_r_ref[...] + b_r_ref[...]    # (BB, 4H)
    sg_r = jax.nn.sigmoid(gates_r)
    th_r = jnp.tanh(gates_r)
    c_r = sg_r[:, 0 * H:1 * H] * th_r[:, 2 * H:3 * H]    # i * g
    h_r = sg_r[:, 3 * H:4 * H] * jnp.tanh(c_r)           # o * tanh(c)

    # ---- final linear: split the weight instead of lane-concatenating h ----
    out = (jnp.dot(h_f, wlin_ref[0:H, :], preferred_element_type=jnp.float32)
           + jnp.dot(h_r, wlin_ref[H:2 * H, :], preferred_element_type=jnp.float32)
           + blin_ref[...])
    out_ref[...] = out


def rnn_forward(tokens, p):
    """tokens: (B, T) integer ids.  Returns logits (B, num_class) float32."""
    B, T = tokens.shape
    H = p["w_hh_f"].shape[0]
    C = p["b_lin"].shape[-1]

    # Batch block: fill sublanes (>= 8 rows), cap at 128 rows so large batches
    # get a multi-step grid that the v7x megacore can split across its 2 TCs.
    if B <= 8:
        bb = 8
    elif B < 128:
        bb = ((B + 7) // 8) * 8
    else:
        bb = 128

    n_blk = pl.cdiv(B, bb)
    b_pad = n_blk * bb

    toks = tokens.astype(jnp.int32)
    if b_pad != B:
        toks = jnp.pad(toks, ((0, b_pad - B), (0, 0)))

    out = pl.pallas_call(
        _bilstm_head_kernel,
        out_shape=jax.ShapeDtypeStruct((b_pad, C), jnp.float32),
        grid=(n_blk,),
        in_specs=[
            pl.BlockSpec((bb, T), lambda i: (i, 0)),          # tokens, blocked over batch
            pl.BlockSpec((1, 4 * H), lambda i: (0, 0)),       # w_ih_f
            pl.BlockSpec((H, 4 * H), lambda i: (0, 0)),       # w_hh_f
            pl.BlockSpec((1, 4 * H), lambda i: (0, 0)),       # b_f
            pl.BlockSpec((1, 4 * H), lambda i: (0, 0)),       # w_ih_r
            pl.BlockSpec((1, 4 * H), lambda i: (0, 0)),       # b_r
            pl.BlockSpec((2 * H, C), lambda i: (0, 0)),       # w_lin
            pl.BlockSpec((1, C), lambda i: (0, 0)),           # b_lin
        ],
        out_specs=pl.BlockSpec((bb, C), lambda i: (i, 0)),
        compiler_params=pltpu.CompilerParams(
            dimension_semantics=("parallel",)),
    )(toks,
      p["w_ih_f"], p["w_hh_f"], p["b_f"],
      p["w_ih_r"], p["b_r"],
      p["w_lin"], p["b_lin"])

    if b_pad != B:
        out = out[:B]
    return out


rnn_forward = jax.jit(rnn_forward)


def init_params(key, hidden_size, num_class):
    """Deterministic init mirroring PyTorch shapes (stored transposed for the kernel)."""
    H = hidden_size
    k = 1.0 / float(H) ** 0.5
    kl = 1.0 / float(2 * H) ** 0.5
    keys = jax.random.split(key, 10)

    def u(kk, shape, bound):
        return jax.random.uniform(kk, shape, jnp.float32, -bound, bound)

    return dict(
        w_ih_f=u(keys[0], (1, 4 * H), k),                            # (4H, 1)^T
        w_hh_f=u(keys[1], (H, 4 * H), k),                            # (4H, H)^T
        b_f=u(keys[2], (1, 4 * H), k) + u(keys[3], (1, 4 * H), k),   # b_ih + b_hh
        w_ih_r=u(keys[4], (1, 4 * H), k),
        w_hh_r=u(keys[5], (H, 4 * H), k),                            # dead for this head
        b_r=u(keys[6], (1, 4 * H), k) + u(keys[7], (1, 4 * H), k),
        w_lin=u(keys[8], (2 * H, num_class), kl),                    # (C, 2H)^T
        b_lin=u(keys[9], (1, num_class), kl),
    )


def rnn_reference(tokens, p):
    """Pure-JAX reference of the full bidirectional forward pass (correctness check)."""
    x = tokens.astype(jnp.float32)[:, :, None]           # (B, T, 1)
    B = x.shape[0]
    H = p["w_hh_f"].shape[0]

    def run_dir(xs_tm, wih, whh, b):                     # xs_tm: (T, B, 1)
        def step(carry, x_t):
            h, c = carry
            gates = x_t @ wih + h @ whh + b
            i = jax.nn.sigmoid(gates[:, 0 * H:1 * H])
            f = jax.nn.sigmoid(gates[:, 1 * H:2 * H])
            g = jnp.tanh(gates[:, 2 * H:3 * H])
            o = jax.nn.sigmoid(gates[:, 3 * H:4 * H])
            c = f * c + i * g
            h = o * jnp.tanh(c)
            return (h, c), h
        init = (jnp.zeros((B, H), jnp.float32), jnp.zeros((B, H), jnp.float32))
        (_, _), hs = lax.scan(step, init, xs_tm)
        return hs                                        # (T, B, H)

    x_tm = jnp.swapaxes(x, 0, 1)                         # (T, B, 1)
    hs_f = run_dir(x_tm, p["w_ih_f"], p["w_hh_f"], p["b_f"])
    hs_r = run_dir(x_tm[::-1], p["w_ih_r"], p["w_hh_r"], p["b_r"])[::-1]
    last = jnp.concatenate([hs_f[-1], hs_r[-1]], axis=-1)    # (B, 2H)
    return last @ p["w_lin"] + p["b_lin"]


if __name__ == "__main__":
    # Module hyper-parameters (small, consistent with the PyTorch __init__).
    param = dict(vocab_size=100, emb_dim=16, hidden_size=32, num_class=4,
                 sequence_len=8, num_layers=1, num_direction=2)
    # TODO(synk): only the num_layers=1 configuration is implemented; deeper stacks
    # would feed each layer's full sequence output into another kernel invocation.

    B = 8   # fills all 8 sublanes of the gate vregs (perf-review item 1)
    key = jax.random.PRNGKey(0)
    k_tok, k_par = jax.random.split(key)

    tokens = jax.random.randint(k_tok, (B, param["sequence_len"]), 0,
                                param["vocab_size"], dtype=jnp.int32)
    params = init_params(k_par, param["hidden_size"], param["num_class"])

    out = rnn_forward(tokens, params)
    out = jax.block_until_ready(out)

    ref = rnn_reference(tokens, params)
    assert out.shape == (B, param["num_class"])
    assert jnp.allclose(out, ref, atol=1e-4, rtol=1e-4), (out, ref)

    print("KERNEL_OK")
</pallas_src>

<mosaic_0001>
module attributes {stable_mosaic.version = 11 : i64} {
  func.func @_bilstm_head_kernel(%arg0: i32, %arg1: memref<8x8xi32, #tpu.memory_space<vmem>>, %arg2: memref<1x128xf32, #tpu.memory_space<vmem>>, %arg3: memref<32x128xf32, #tpu.memory_space<vmem>>, %arg4: memref<1x128xf32, #tpu.memory_space<vmem>>, %arg5: memref<1x128xf32, #tpu.memory_space<vmem>>, %arg6: memref<1x128xf32, #tpu.memory_space<vmem>>, %arg7: memref<64x4xf32, #tpu.memory_space<vmem>>, %arg8: memref<1x4xf32, #tpu.memory_space<vmem>>, %arg9: memref<8x4xf32, #tpu.memory_space<vmem>>) attributes {dimension_semantics = [#tpu.dimension_semantics<parallel>], iteration_bounds = array<i64: 1>, scalar_prefetch = 0 : i64, scratch_operands = 0 : i64, tpu.core_type = #tpu.core_type<tc>, window_params = [{transform_indices = @transform_0, window_bounds = array<i64: 8, 8>}, {pipeline_mode = #tpu.pipeline_mode<synchronous>, transform_indices = @transform_1, window_bounds = array<i64: 1, 128>}, {pipeline_mode = #tpu.pipeline_mode<synchronous>, transform_indices = @transform_2, window_bounds = array<i64: 32, 128>}, {pipeline_mode = #tpu.pipeline_mode<synchronous>, transform_indices = @transform_3, window_bounds = array<i64: 1, 128>}, {pipeline_mode = #tpu.pipeline_mode<synchronous>, transform_indices = @transform_4, window_bounds = array<i64: 1, 128>}, {pipeline_mode = #tpu.pipeline_mode<synchronous>, transform_indices = @transform_5, window_bounds = array<i64: 1, 128>}, {pipeline_mode = #tpu.pipeline_mode<synchronous>, transform_indices = @transform_6, window_bounds = array<i64: 64, 4>}, {pipeline_mode = #tpu.pipeline_mode<synchronous>, transform_indices = @transform_7, window_bounds = array<i64: 1, 4>}, {transform_indices = @transform_8, window_bounds = array<i64: 8, 4>}]} {
    %c0 = arith.constant 0 : index
    %c0_0 = arith.constant 0 : index
    %0 = vector.load %arg1[%c0, %c0_0] : memref<8x8xi32, #tpu.memory_space<vmem>>, vector<8x8xi32>
    %1 = arith.sitofp %0 : vector<8x8xi32> to vector<8x8xf32>
    %c0_1 = arith.constant 0 : index
    %c0_2 = arith.constant 0 : index
    %2 = vector.load %arg2[%c0_1, %c0_2] : memref<1x128xf32, #tpu.memory_space<vmem>>, vector<1x128xf32>
    %c0_3 = arith.constant 0 : index
    %c0_4 = arith.constant 0 : index
    %3 = vector.load %arg4[%c0_3, %c0_4] : memref<1x128xf32, #tpu.memory_space<vmem>>, vector<1x128xf32>
    %c0_5 = arith.constant 0 : index
    %c0_6 = arith.constant 0 : index
    %4 = vector.load %arg3[%c0_5, %c0_6] : memref<32x128xf32, #tpu.memory_space<vmem>>, vector<32x128xf32>
    %5 = vector.extract_strided_slice %1 {offsets = [0, 0], sizes = [8, 1], strides = [1, 1]} : vector<8x8xf32> to vector<8x1xf32>
    %6 = vector.broadcast %5 : vector<8x1xf32> to vector<8x128xf32>
    %7 = vector.broadcast %2 : vector<1x128xf32> to vector<8x128xf32>
    %8 = arith.mulf %6, %7 : vector<8x128xf32>
    %9 = vector.broadcast %3 : vector<1x128xf32> to vector<8x128xf32>
    %10 = arith.addf %8, %9 : vector<8x128xf32>
    %11 = vector.extract_strided_slice %1 {offsets = [0, 1], sizes = [8, 1], strides = [1, 1]} : vector<8x8xf32> to vector<8x1xf32>
    %12 = vector.broadcast %11 : vector<8x1xf32> to vector<8x128xf32>
    %13 = vector.broadcast %2 : vector<1x128xf32> to vector<8x128xf32>
    %14 = arith.mulf %12, %13 : vector<8x128xf32>
    %15 = vector.broadcast %3 : vector<1x128xf32> to vector<8x128xf32>
    %16 = arith.addf %14, %15 : vector<8x128xf32>
    %17 = vector.extract_strided_slice %1 {offsets = [0, 2], sizes = [8, 1], strides = [1, 1]} : vector<8x8xf32> to vector<8x1xf32>
    %18 = vector.broadcast %17 : vector<8x1xf32> to vector<8x128xf32>
    %19 = vector.broadcast %2 : vector<1x128xf32> to vector<8x128xf32>
    %20 = arith.mulf %18, %19 : vector<8x128xf32>
    %21 = vector.broadcast %3 : vector<1x128xf32> to vector<8x128xf32>
    %22 = arith.addf %20, %21 : vector<8x128xf32>
    %23 = vector.extract_strided_slice %1 {offsets = [0, 3], sizes = [8, 1], strides = [1, 1]} : vector<8x8xf32> to vector<8x1xf32>
    %24 = vector.broadcast %23 : vector<8x1xf32> to vector<8x128xf32>
    %25 = vector.broadcast %2 : vector<1x128xf32> to vector<8x128xf32>
    %26 = arith.mulf %24, %25 : vector<8x128xf32>
    %27 = vector.broadcast %3 : vector<1x128xf32> to vector<8x128xf32>
    %28 = arith.addf %26, %27 : vector<8x128xf32>
    %29 = vector.extract_strided_slice %1 {offsets = [0, 4], sizes = [8, 1], strides = [1, 1]} : vector<8x8xf32> to vector<8x1xf32>
    %30 = vector.broadcast %29 : vector<8x1xf32> to vector<8x128xf32>
    %31 = vector.broadcast %2 : vector<1x128xf32> to vector<8x128xf32>
    %32 = arith.mulf %30, %31 : vector<8x128xf32>
    %33 = vector.broadcast %3 : vector<1x128xf32> to vector<8x128xf32>
    %34 = arith.addf %32, %33 : vector<8x128xf32>
    %35 = vector.extract_strided_slice %1 {offsets = [0, 5], sizes = [8, 1], strides = [1, 1]} : vector<8x8xf32> to vector<8x1xf32>
    %36 = vector.broadcast %35 : vector<8x1xf32> to vector<8x128xf32>
    %37 = vector.broadcast %2 : vector<1x128xf32> to vector<8x128xf32>
    %38 = arith.mulf %36, %37 : vector<8x128xf32>
    %39 = vector.broadcast %3 : vector<1x128xf32> to vector<8x128xf32>
    %40 = arith.addf %38, %39 : vector<8x128xf32>
    %41 = vector.extract_strided_slice %1 {offsets = [0, 6], sizes = [8, 1], strides = [1, 1]} : vector<8x8xf32> to vector<8x1xf32>
    %42 = vector.broadcast %41 : vector<8x1xf32> to vector<8x128xf32>
    %43 = vector.broadcast %2 : vector<1x128xf32> to vector<8x128xf32>
    %44 = arith.mulf %42, %43 : vector<8x128xf32>
    %45 = vector.broadcast %3 : vector<1x128xf32> to vector<8x128xf32>
    %46 = arith.addf %44, %45 : vector<8x128xf32>
    %47 = vector.extract_strided_slice %1 {offsets = [0, 7], sizes = [8, 1], strides = [1, 1]} : vector<8x8xf32> to vector<8x1xf32>
    %48 = vector.broadcast %47 : vector<8x1xf32> to vector<8x128xf32>
    %49 = vector.broadcast %2 : vector<1x128xf32> to vector<8x128xf32>
    %50 = arith.mulf %48, %49 : vector<8x128xf32>
    %51 = vector.broadcast %3 : vector<1x128xf32> to vector<8x128xf32>
    %52 = arith.addf %50, %51 : vector<8x128xf32>
    %cst = arith.constant 0.000000e+00 : f32
    %53 = vector.broadcast %cst : f32 to vector<8x32xf32>
    %cst_7 = arith.constant 0.000000e+00 : f32
    %54 = vector.broadcast %cst_7 : f32 to vector<8x32xf32>
    %cst_8 = arith.constant dense<0.000000e+00> : vector<8x128xf32>
    %55 = tpu.matmul %53, %4, %cst_8 {dimension_numbers = #tpu.dot_dimension_numbers<[1], [0], [0], [1], [0, 0, 1, 1], [], []>} : vector<8x32xf32>, vector<32x128xf32>, vector<8x128xf32> -> vector<8x128xf32>
    %56 = arith.addf %10, %55 : vector<8x128xf32>
    %57 = arith.negf %56 : vector<8x128xf32>
    %58 = math.exp %57 : vector<8x128xf32>
    %cst_9 = arith.constant 1.000000e+00 : f32
    %59 = vector.broadcast %cst_9 : f32 to vector<8x128xf32>
    %60 = arith.addf %59, %58 : vector<8x128xf32>
    %61 = arith.divf %59, %60 : vector<8x128xf32>
    %62 = math.tanh %56 : vector<8x128xf32>
    %63 = vector.extract_strided_slice %61 {offsets = [0, 0], sizes = [8, 32], strides = [1, 1]} : vector<8x128xf32> to vector<8x32xf32>
    %64 = vector.extract_strided_slice %61 {offsets = [0, 32], sizes = [8, 32], strides = [1, 1]} : vector<8x128xf32> to vector<8x32xf32>
    %65 = vector.extract_strided_slice %62 {offsets = [0, 64], sizes = [8, 32], strides = [1, 1]} : vector<8x128xf32> to vector<8x32xf32>
    %66 = vector.extract_strided_slice %61 {offsets = [0, 96], sizes = [8, 32], strides = [1, 1]} : vector<8x128xf32> to vector<8x32xf32>
    %67 = arith.mulf %64, %54 : vector<8x32xf32>
    %68 = arith.mulf %63, %65 : vector<8x32xf32>
    %69 = arith.addf %67, %68 : vector<8x32xf32>
    %70 = math.tanh %69 : vector<8x32xf32>
    %71 = arith.mulf %66, %70 : vector<8x32xf32>
    %cst_10 = arith.constant dense<0.000000e+00> : vector<8x128xf32>
    %72 = tpu.matmul %71, %4, %cst_10 {dimension_numbers = #tpu.dot_dimension_numbers<[1], [0], [0], [1], [0, 0, 1, 1], [], []>} : vector<8x32xf32>, vector<32x128xf32>, vector<8x128xf32> -> vector<8x128xf32>
    %73 = arith.addf %16, %72 : vector<8x128xf32>
    %74 = arith.negf %73 : vector<8x128xf32>
    %75 = math.exp %74 : vector<8x128xf32>
    %cst_11 = arith.constant 1.000000e+00 : f32
    %76 = vector.broadcast %cst_11 : f32 to vector<8x128xf32>
    %77 = arith.addf %76, %75 : vector<8x128xf32>
    %78 = arith.divf %76, %77 : vector<8x128xf32>
    %79 = math.tanh %73 : vector<8x128xf32>
    %80 = vector.extract_strided_slice %78 {offsets = [0, 0], sizes = [8, 32], strides = [1, 1]} : vector<8x128xf32> to vector<8x32xf32>
    %81 = vector.extract_strided_slice %78 {offsets = [0, 32], sizes = [8, 32], strides = [1, 1]} : vector<8x128xf32> to vector<8x32xf32>
    %82 = vector.extract_strided_slice %79 {offsets = [0, 64], sizes = [8, 32], strides = [1, 1]} : vector<8x128xf32> to vector<8x32xf32>
    %83 = vector.extract_strided_slice %78 {offsets = [0, 96], sizes = [8, 32], strides = [1, 1]} : vector<8x128xf32> to vector<8x32xf32>
    %84 = arith.mulf %81, %69 : vector<8x32xf32>
    %85 = arith.mulf %80, %82 : vector<8x32xf32>
    %86 = arith.addf %84, %85 : vector<8x32xf32>
    %87 = math.tanh %86 : vector<8x32xf32>
    %88 = arith.mulf %83, %87 : vector<8x32xf32>
    %cst_12 = arith.constant dense<0.000000e+00> : vector<8x128xf32>
    %89 = tpu.matmul %88, %4, %cst_12 {dimension_numbers = #tpu.dot_dimension_numbers<[1], [0], [0], [1], [0, 0, 1, 1], [], []>} : vector<8x32xf32>, vector<32x128xf32>, vector<8x128xf32> -> vector<8x128xf32>
    %90 = arith.addf %22, %89 : vector<8x128xf32>
    %91 = arith.negf %90 : vector<8x128xf32>
    %92 = math.exp %91 : vector<8x128xf32>
    %cst_13 = arith.constant 1.000000e+00 : f32
    %93 = vector.broadcast %cst_13 : f32 to vector<8x128xf32>
    %94 = arith.addf %93, %92 : vector<8x128xf32>
    %95 = arith.divf %93, %94 : vector<8x128xf32>
    %96 = math.tanh %90 : vector<8x128xf32>
    %97 = vector.extract_strided_slice %95 {offsets = [0, 0], sizes = [8, 32], strides = [1, 1]} : vector<8x128xf32> to vector<8x32xf32>
    %98 = vector.extract_strided_slice %95 {offsets = [0, 32], sizes = [8, 32], strides = [1, 1]} : vector<8x128xf32> to vector<8x32xf32>
    %99 = vector.extract_strided_slice %96 {offsets = [0, 64], sizes = [8, 32], strides = [1, 1]} : vector<8x128xf32> to vector<8x32xf32>
    %100 = vector.extract_strided_slice %95 {offsets = [0, 96], sizes = [8, 32], strides = [1, 1]} : vector<8x128xf32> to vector<8x32xf32>
    %101 = arith.mulf %98, %86 : vector<8x32xf32>
    %102 = arith.mulf %97, %99 : vector<8x32xf32>
    %103 = arith.addf %101, %102 : vector<8x32xf32>
    %104 = math.tanh %103 : vector<8x32xf32>
    %105 = arith.mulf %100, %104 : vector<8x32xf32>
    %cst_14 = arith.constant dense<0.000000e+00> : vector<8x128xf32>
    %106 = tpu.matmul %105, %4, %cst_14 {dimension_numbers = #tpu.dot_dimension_numbers<[1], [0], [0], [1], [0, 0, 1, 1], [], []>} : vector<8x32xf32>, vector<32x128xf32>, vector<8x128xf32> -> vector<8x128xf32>
    %107 = arith.addf %28, %106 : vector<8x128xf32>
    %108 = arith.negf %107 : vector<8x128xf32>
    %109 = math.exp %108 : vector<8x128xf32>
    %cst_15 = arith.constant 1.000000e+00 : f32
    %110 = vector.broadcast %cst_15 : f32 to vector<8x128xf32>
    %111 = arith.addf %110, %109 : vector<8x128xf32>
    %112 = arith.divf %110, %111 : vector<8x128xf32>
    %113 = math.tanh %107 : vector<8x128xf32>
    %114 = vector.extract_strided_slice %112 {offsets = [0, 0], sizes = [8, 32], strides = [1, 1]} : vector<8x128xf32> to vector<8x32xf32>
    %115 = vector.extract_strided_slice %112 {offsets = [0, 32], sizes = [8, 32], strides = [1, 1]} : vector<8x128xf32> to vector<8x32xf32>
    %116 = vector.extract_strided_slice %113 {offsets = [0, 64], sizes = [8, 32], strides = [1, 1]} : vector<8x128xf32> to vector<8x32xf32>
    %117 = vector.extract_strided_slice %112 {offsets = [0, 96], sizes = [8, 32], strides = [1, 1]} : vector<8x128xf32> to vector<8x32xf32>
    %118 = arith.mulf %115, %103 : vector<8x32xf32>
    %119 = arith.mulf %114, %116 : vector<8x32xf32>
    %120 = arith.addf %118, %119 : vector<8x32xf32>
    %121 = math.tanh %120 : vector<8x32xf32>
    %122 = arith.mulf %117, %121 : vector<8x32xf32>
    %cst_16 = arith.constant dense<0.000000e+00> : vector<8x128xf32>
    %123 = tpu.matmul %122, %4, %cst_16 {dimension_numbers = #tpu.dot_dimension_numbers<[1], [0], [0], [1], [0, 0, 1, 1], [], []>} : vector<8x32xf32>, vector<32x128xf32>, vector<8x128xf32> -> vector<8x128xf32>
    %124 = arith.addf %34, %123 : vector<8x128xf32>
    %125 = arith.negf %124 : vector<8x128xf32>
    %126 = math.exp %125 : vector<8x128xf32>
    %cst_17 = arith.constant 1.000000e+00 : f32
    %127 = vector.broadcast %cst_17 : f32 to vector<8x128xf32>
    %128 = arith.addf %127, %126 : vector<8x128xf32>
    %129 = arith.divf %127, %128 : vector<8x128xf32>
    %130 = math.tanh %124 : vector<8x128xf32>
    %131 = vector.extract_strided_slice %129 {offsets = [0, 0], sizes = [8, 32], strides = [1, 1]} : vector<8x128xf32> to vector<8x32xf32>
    %132 = vector.extract_strided_slice %129 {offsets = [0, 32], sizes = [8, 32], strides = [1, 1]} : vector<8x128xf32> to vector<8x32xf32>
    %133 = vector.extract_strided_slice %130 {offsets = [0, 64], sizes = [8, 32], strides = [1, 1]} : vector<8x128xf32> to vector<8x32xf32>
    %134 = vector.extract_strided_slice %129 {offsets = [0, 96], sizes = [8, 32], strides = [1, 1]} : vector<8x128xf32> to vector<8x32xf32>
    %135 = arith.mulf %132, %120 : vector<8x32xf32>
    %136 = arith.mulf %131, %133 : vector<8x32xf32>
    %137 = arith.addf %135, %136 : vector<8x32xf32>
    %138 = math.tanh %137 : vector<8x32xf32>
    %139 = arith.mulf %134, %138 : vector<8x32xf32>
    %cst_18 = arith.constant dense<0.000000e+00> : vector<8x128xf32>
    %140 = tpu.matmul %139, %4, %cst_18 {dimension_numbers = #tpu.dot_dimension_numbers<[1], [0], [0], [1], [0, 0, 1, 1], [], []>} : vector<8x32xf32>, vector<32x128xf32>, vector<8x128xf32> -> vector<8x128xf32>
    %141 = arith.addf %40, %140 : vector<8x128xf32>
    %142 = arith.negf %141 : vector<8x128xf32>
    %143 = math.exp %142 : vector<8x128xf32>
    %cst_19 = arith.constant 1.000000e+00 : f32
    %144 = vector.broadcast %cst_19 : f32 to vector<8x128xf32>
    %145 = arith.addf %144, %143 : vector<8x128xf32>
    %146 = arith.divf %144, %145 : vector<8x128xf32>
    %147 = math.tanh %141 : vector<8x128xf32>
    %148 = vector.extract_strided_slice %146 {offsets = [0, 0], sizes = [8, 32], strides = [1, 1]} : vector<8x128xf32> to vector<8x32xf32>
    %149 = vector.extract_strided_slice %146 {offsets = [0, 32], sizes = [8, 32], strides = [1, 1]} : vector<8x128xf32> to vector<8x32xf32>
    %150 = vector.extract_strided_slice %147 {offsets = [0, 64], sizes = [8, 32], strides = [1, 1]} : vector<8x128xf32> to vector<8x32xf32>
    %151 = vector.extract_strided_slice %146 {offsets = [0, 96], sizes = [8, 32], strides = [1, 1]} : vector<8x128xf32> to vector<8x32xf32>
    %152 = arith.mulf %149, %137 : vector<8x32xf32>
    %153 = arith.mulf %148, %150 : vector<8x32xf32>
    %154 = arith.addf %152, %153 : vector<8x32xf32>
    %155 = math.tanh %154 : vector<8x32xf32>
    %156 = arith.mulf %151, %155 : vector<8x32xf32>
    %cst_20 = arith.constant dense<0.000000e+00> : vector<8x128xf32>
    %157 = tpu.matmul %156, %4, %cst_20 {dimension_numbers = #tpu.dot_dimension_numbers<[1], [0], [0], [1], [0, 0, 1, 1], [], []>} : vector<8x32xf32>, vector<32x128xf32>, vector<8x128xf32> -> vector<8x128xf32>
    %158 = arith.addf %46, %157 : vector<8x128xf32>
    %159 = arith.negf %158 : vector<8x128xf32>
    %160 = math.exp %159 : vector<8x128xf32>
    %cst_21 = arith.constant 1.000000e+00 : f32
    %161 = vector.broadcast %cst_21 : f32 to vector<8x128xf32>
    %162 = arith.addf %161, %160 : vector<8x128xf32>
    %163 = arith.divf %161, %162 : vector<8x128xf32>
    %164 = math.tanh %158 : vector<8x128xf32>
    %165 = vector.extract_strided_slice %163 {offsets = [0, 0], sizes = [8, 32], strides = [1, 1]} : vector<8x128xf32> to vector<8x32xf32>
    %166 = vector.extract_strided_slice %163 {offsets = [0, 32], sizes = [8, 32], strides = [1, 1]} : vector<8x128xf32> to vector<8x32xf32>
    %167 = vector.extract_strided_slice %164 {offsets = [0, 64], sizes = [8, 32], strides = [1, 1]} : vector<8x128xf32> to vector<8x32xf32>
    %168 = vector.extract_strided_slice %163 {offsets = [0, 96], sizes = [8, 32], strides = [1, 1]} : vector<8x128xf32> to vector<8x32xf32>
    %169 = arith.mulf %166, %154 : vector<8x32xf32>
    %170 = arith.mulf %165, %167 : vector<8x32xf32>
    %171 = arith.addf %169, %170 : vector<8x32xf32>
    %172 = math.tanh %171 : vector<8x32xf32>
    %173 = arith.mulf %168, %172 : vector<8x32xf32>
    %cst_22 = arith.constant dense<0.000000e+00> : vector<8x128xf32>
    %174 = tpu.matmul %173, %4, %cst_22 {dimension_numbers = #tpu.dot_dimension_numbers<[1], [0], [0], [1], [0, 0, 1, 1], [], []>} : vector<8x32xf32>, vector<32x128xf32>, vector<8x128xf32> -> vector<8x128xf32>
    %175 = arith.addf %52, %174 : vector<8x128xf32>
    %176 = arith.negf %175 : vector<8x128xf32>
    %177 = math.exp %176 : vector<8x128xf32>
    %cst_23 = arith.constant 1.000000e+00 : f32
    %178 = vector.broadcast %cst_23 : f32 to vector<8x128xf32>
    %179 = arith.addf %178, %177 : vector<8x128xf32>
    %180 = arith.divf %178, %179 : vector<8x128xf32>
    %181 = math.tanh %175 : vector<8x128xf32>
    %182 = vector.extract_strided_slice %180 {offsets = [0, 0], sizes = [8, 32], strides = [1, 1]} : vector<8x128xf32> to vector<8x32xf32>
    %183 = vector.extract_strided_slice %180 {offsets = [0, 32], sizes = [8, 32], strides = [1, 1]} : vector<8x128xf32> to vector<8x32xf32>
    %184 = vector.extract_strided_slice %181 {offsets = [0, 64], sizes = [8, 32], strides = [1, 1]} : vector<8x128xf32> to vector<8x32xf32>
    %185 = vector.extract_strided_slice %180 {offsets = [0, 96], sizes = [8, 32], strides = [1, 1]} : vector<8x128xf32> to vector<8x32xf32>
    %186 = arith.mulf %183, %171 : vector<8x32xf32>
    %187 = arith.mulf %182, %184 : vector<8x32xf32>
    %188 = arith.addf %186, %187 : vector<8x32xf32>
    %189 = math.tanh %188 : vector<8x32xf32>
    %190 = arith.mulf %185, %189 : vector<8x32xf32>
    %191 = vector.extract_strided_slice %1 {offsets = [0, 7], sizes = [8, 1], strides = [1, 1]} : vector<8x8xf32> to vector<8x1xf32>
    %c0_24 = arith.constant 0 : index
    %c0_25 = arith.constant 0 : index
    %192 = vector.load %arg5[%c0_24, %c0_25] : memref<1x128xf32, #tpu.memory_space<vmem>>, vector<1x128xf32>
    %193 = vector.broadcast %191 : vector<8x1xf32> to vector<8x128xf32>
    %194 = vector.broadcast %192 : vector<1x128xf32> to vector<8x128xf32>
    %195 = arith.mulf %193, %194 : vector<8x128xf32>
    %c0_26 = arith.constant 0 : index
    %c0_27 = arith.constant 0 : index
    %196 = vector.load %arg6[%c0_26, %c0_27] : memref<1x128xf32, #tpu.memory_space<vmem>>, vector<1x128xf32>
    %197 = vector.broadcast %196 : vector<1x128xf32> to vector<8x128xf32>
    %198 = arith.addf %195, %197 : vector<8x128xf32>
    %199 = arith.negf %198 : vector<8x128xf32>
    %200 = math.exp %199 : vector<8x128xf32>
    %cst_28 = arith.constant 1.000000e+00 : f32
    %201 = vector.broadcast %cst_28 : f32 to vector<8x128xf32>
    %202 = arith.addf %201, %200 : vector<8x128xf32>
    %203 = arith.divf %201, %202 : vector<8x128xf32>
    %204 = math.tanh %198 : vector<8x128xf32>
    %205 = vector.extract_strided_slice %203 {offsets = [0, 0], sizes = [8, 32], strides = [1, 1]} : vector<8x128xf32> to vector<8x32xf32>
    %206 = vector.extract_strided_slice %204 {offsets = [0, 64], sizes = [8, 32], strides = [1, 1]} : vector<8x128xf32> to vector<8x32xf32>
    %207 = arith.mulf %205, %206 : vector<8x32xf32>
    %208 = vector.extract_strided_slice %203 {offsets = [0, 96], sizes = [8, 32], strides = [1, 1]} : vector<8x128xf32> to vector<8x32xf32>
    %209 = math.tanh %207 : vector<8x32xf32>
    %210 = arith.mulf %208, %209 : vector<8x32xf32>
    %c0_29 = arith.constant 0 : index
    %c0_30 = arith.constant 0 : index
    %211 = vector.load %arg7[%c0_29, %c0_30] : memref<64x4xf32, #tpu.memory_space<vmem>>, vector<32x4xf32>
    %cst_31 = arith.constant dense<0.000000e+00> : vector<8x4xf32>
    %212 = tpu.matmul %190, %211, %cst_31 {dimension_numbers = #tpu.dot_dimension_numbers<[1], [0], [0], [1], [0, 0, 1, 1], [], []>} : vector<8x32xf32>, vector<32x4xf32>, vector<8x4xf32> -> vector<8x4xf32>
    %c32 = arith.constant 32 : index
    %c0_32 = arith.constant 0 : index
    %213 = vector.load %arg7[%c32, %c0_32] : memref<64x4xf32, #tpu.memory_space<vmem>>, vector<32x4xf32>
    %cst_33 = arith.constant dense<0.000000e+00> : vector<8x4xf32>
    %214 = tpu.matmul %210, %213, %cst_33 {dimension_numbers = #tpu.dot_dimension_numbers<[1], [0], [0], [1], [0, 0, 1, 1], [], []>} : vector<8x32xf32>, vector<32x4xf32>, vector<8x4xf32> -> vector<8x4xf32>
    %215 = arith.addf %212, %214 : vector<8x4xf32>
    %c0_34 = arith.constant 0 : index
    %c0_35 = arith.constant 0 : index
    %216 = vector.load %arg8[%c0_34, %c0_35] : memref<1x4xf32, #tpu.memory_space<vmem>>, vector<1x4xf32>
    %217 = vector.broadcast %216 : vector<1x4xf32> to vector<8x4xf32>
    %218 = arith.addf %215, %217 : vector<8x4xf32>
    %c0_36 = arith.constant 0 : index
    %c0_37 = arith.constant 0 : index
    %219 = vector.load %arg9[%c0_36, %c0_37] : memref<8x4xf32, #tpu.memory_space<vmem>>, vector<8x4xf32>
    tpu.vector_store %arg9[%c0_36, %c0_37], %218 {strides = array<i32>} : memref<8x4xf32, #tpu.memory_space<vmem>>, vector<8x4xf32>,
    return
  }
  func.func @transform_0(%arg0: i32) -> (i32, i32) {
    %c0_i32 = arith.constant 0 : i32
    %c0_i32_0 = arith.constant 0 : i32
    return %arg0, %c0_i32 : i32, i32
  }
  func.func @transform_1(%arg0: i32) -> (i32, i32) {
    %c0_i32 = arith.constant 0 : i32
    %c0_i32_0 = arith.constant 0 : i32
    %c0_i32_1 = arith.constant 0 : i32
    return %c0_i32, %c0_i32_0 : i32, i32
  }
  func.func @transform_2(%arg0: i32) -> (i32, i32) {
    %c0_i32 = arith.constant 0 : i32
    %c0_i32_0 = arith.constant 0 : i32
    %c0_i32_1 = arith.constant 0 : i32
    return %c0_i32, %c0_i32_0 : i32, i32
  }
  func.func @transform_3(%arg0: i32) -> (i32, i32) {
    %c0_i32 = arith.constant 0 : i32
    %c0_i32_0 = arith.constant 0 : i32
    %c0_i32_1 = arith.constant 0 : i32
    return %c0_i32, %c0_i32_0 : i32, i32
  }
  func.func @transform_4(%arg0: i32) -> (i32, i32) {
    %c0_i32 = arith.constant 0 : i32
    %c0_i32_0 = arith.constant 0 : i32
    %c0_i32_1 = arith.constant 0 : i32
    return %c0_i32, %c0_i32_0 : i32, i32
  }
  func.func @transform_5(%arg0: i32) -> (i32, i32) {
    %c0_i32 = arith.constant 0 : i32
    %c0_i32_0 = arith.constant 0 : i32
    %c0_i32_1 = arith.constant 0 : i32
    return %c0_i32, %c0_i32_0 : i32, i32
  }
  func.func @transform_6(%arg0: i32) -> (i32, i32) {
    %c0_i32 = arith.constant 0 : i32
    %c0_i32_0 = arith.constant 0 : i32
    %c0_i32_1 = arith.constant 0 : i32
    return %c0_i32, %c0_i32_0 : i32, i32
  }
  func.func @transform_7(%arg0: i32) -> (i32, i32) {
    %c0_i32 = arith.constant 0 : i32
    %c0_i32_0 = arith.constant 0 : i32
    %c0_i32_1 = arith.constant 0 : i32
    return %c0_i32, %c0_i32_0 : i32, i32
  }
  func.func @transform_8(%arg0: i32) -> (i32, i32) {
    %c0_i32 = arith.constant 0 : i32
    %c0_i32_0 = arith.constant 0 : i32
    return %arg0, %c0_i32 : i32, i32
  }
}

</mosaic_0001>

<llo_original>
// kernel: rnn_forward.1
$region0: #{rnn_forward.1}
  #allocation0 [shape = 'u32[]', space=smem, size = 0x4, offset = 0x4, fixed_abs, tag = 'smem constant byte address 0x4 - core index']
  #allocation1 [shape = 'u32[72,128]{1,0:T(1,128)}', space=vmem, size = 0x9000, scoped, tag = 'internal scratch']
  %s0 = inlined_call_operand.vmem [shape: s32[8,8], index: 0, kind: input, shape index: {}]
  %s1 = inlined_call_operand.vmem [shape: f32[1,128], index: 1, kind: input, shape index: {}]
  %s2 = inlined_call_operand.vmem [shape: f32[32,128], index: 2, kind: input, shape index: {}]
  %s3 = inlined_call_operand.vmem [shape: f32[1,128], index: 3, kind: input, shape index: {}]
  %s4 = inlined_call_operand.vmem [shape: f32[1,128], index: 4, kind: input, shape index: {}]
  %s5 = inlined_call_operand.vmem [shape: f32[1,128], index: 5, kind: input, shape index: {}]
  %s6 = inlined_call_operand.vmem [shape: f32[64,4], index: 6, kind: input, shape index: {}]
  %s7 = inlined_call_operand.vmem [shape: f32[1,4], index: 7, kind: input, shape index: {}]
  %s8 = inlined_call_operand.vmem [shape: f32[8,4], index: 8, kind: output, shape index: {}]
  %s9 = sld [smem:[#allocation0]]
  $region42: #{rnn_forward.1} parent=0
    _
  %s11 = ssub.s32 1, %s9
  %s12 = scalar_select 0, %s11, %s9
  // Predicated region
  $region2: #{rnn_forward.1} parent=0 // pred_check
    _
  $region3: #{rnn_forward.1} parent=0 // pred_check_branch
    %14 = sbr.rel (0) target = $region5
  $region4: #{rnn_forward.1} parent=0 // pred_region
    _
  $region5: #{rnn_forward.1} parent=0 // pred_fallthru
    _
  // Predicated region
  $region6: #{rnn_forward.1} parent=0 // pred_check
    _
  $region7: #{rnn_forward.1} parent=0 // pred_check_branch
    %16 = sbr.rel (0) target = $region9
  $region8: #{rnn_forward.1} parent=0 // pred_region
    _
  $region9: #{rnn_forward.1} parent=0 // pred_fallthru
    _
  // Predicated region
  $region10: #{rnn_forward.1} parent=0 // pred_check
    _
  $region11: #{rnn_forward.1} parent=0 // pred_check_branch
    %18 = sbr.rel (0) target = $region13
  $region12: #{rnn_forward.1} parent=0 // pred_region
    _
  $region13: #{rnn_forward.1} parent=0 // pred_fallthru
    _
  // Predicated region
  $region14: #{rnn_forward.1} parent=0 // pred_check
    _
  $region15: #{rnn_forward.1} parent=0 // pred_check_branch
    %20 = sbr.rel (0) target = $region17
  $region16: #{rnn_forward.1} parent=0 // pred_region
    _
  $region17: #{rnn_forward.1} parent=0 // pred_fallthru
    _
  // Predicated region
  $region18: #{rnn_forward.1} parent=0 // pred_check
    _
  $region19: #{rnn_forward.1} parent=0 // pred_check_branch
    %22 = sbr.rel (0) target = $region21
  $region20: #{rnn_forward.1} parent=0 // pred_region
    _
  $region21: #{rnn_forward.1} parent=0 // pred_fallthru
    _
  // Predicated region
  $region22: #{rnn_forward.1} parent=0 // pred_check
    _
  $region23: #{rnn_forward.1} parent=0 // pred_check_branch
    %24 = sbr.rel (0) target = $region25
  $region24: #{rnn_forward.1} parent=0 // pred_region
    _
  $region25: #{rnn_forward.1} parent=0 // pred_fallthru
    _
  // Predicated region
  $region26: #{rnn_forward.1} parent=0 // pred_check
    _
  $region27: #{rnn_forward.1} parent=0 // pred_check_branch
    %26 = sbr.rel (0) target = $region29
  $region28: #{rnn_forward.1} parent=0 // pred_region
    _
  $region29: #{rnn_forward.1} parent=0 // pred_fallthru
    _
  // Predicated region
  $region30: #{rnn_forward.1} parent=0 // pred_check
    _
  $region31: #{rnn_forward.1} parent=0 // pred_check_branch
    %28 = sbr.rel (0) target = $region33
  $region32: #{rnn_forward.1} parent=0 // pred_region
    _
  $region33: #{rnn_forward.1} parent=0 // pred_fallthru
    _
  %v29 = vld [vmem:[%s0] sm:$0xff]
  %v30 = vcvt.s32.f32 %v29
  %v31 = vld [vmem:[%s1] sm:$0x1]
  %v32 = vld [vmem:[%s3] sm:$0x1]
  %v33 = vld [vmem:[%s2] sm:$0xff]
  %v34 = vld [vmem:[%s2 + $0x8] sm:$0xff]
  %v35 = vld [vmem:[%s2 + $0x10] sm:$0xff]
  %v36 = vld [vmem:[%s2 + $0x18] sm:$0xff]
  %38 = vset.pattern.permute.xlu0 0
  %39 = vperm.xlu0 %38, %v30
  %v40 = vpop.permute.xlu0 %39
  %v43 = vperm.slane %v31, 0
  %v45 = vmul.f32 %v40, %v43
  %v47 = vperm.slane %v32, 0
  %v49 = vadd.f32 %v45, %v47
  %50 = vset.pattern.permute.xlu0 1
  %51 = vperm.xlu0 %50, %v30
  %v52 = vpop.permute.xlu0 %51
  %v54 = vmul.f32 %v52, %v43
  %v55 = vadd.f32 %v54, %v47
  %56 = vset.pattern.permute.xlu0 2
  %57 = vperm.xlu0 %56, %v30
  %v58 = vpop.permute.xlu0 %57
  %v60 = vmul.f32 %v58, %v43
  %v61 = vadd.f32 %v60, %v47
  %62 = vset.pattern.permute.xlu0 3
  %63 = vperm.xlu0 %62, %v30
  %v64 = vpop.permute.xlu0 %63
  %v66 = vmul.f32 %v64, %v43
  %v67 = vadd.f32 %v66, %v47
  %68 = vset.pattern.permute.xlu0 4
  %69 = vperm.xlu0 %68, %v30
  %v70 = vpop.permute.xlu0 %69
  %v72 = vmul.f32 %v70, %v43
  %v73 = vadd.f32 %v72, %v47
  %74 = vset.pattern.permute.xlu0 5
  %75 = vperm.xlu0 %74, %v30
  %v76 = vpop.permute.xlu0 %75
  %v78 = vmul.f32 %v76, %v43
  %v79 = vadd.f32 %v78, %v47
  %80 = vset.pattern.permute.xlu0 6
  %81 = vperm.xlu0 %80, %v30
  %v82 = vpop.permute.xlu0 %81
  %v84 = vmul.f32 %v82, %v43
  %v85 = vadd.f32 %v84, %v47
  %86 = vset.pattern.permute.xlu0 7
  %87 = vperm.xlu0 %86, %v30
  %v88 = vpop.permute.xlu0 %87
  %v90 = vmul.f32 %v88, %v43
  %v91 = vadd.f32 %v90, %v47
  %vm92 = vcmask 261120
  %v94 = vsel %vm92, 0.0, 0
  %96 = vmatpush.msra.mxu0 0.0
  %97 = vmatpush.msra.mxu0 0.0
  %98 = vmatpush.msra.mxu0 0.0
  %99 = vmatpush.msra.mxu0 0.0
  %100 = vmatpush.msra.mxu0 0.0
  %101 = vmatpush.msra.mxu0 0.0
  %102 = vmatpush.msra.mxu0 0.0
  %103 = vmatpush.msra.mxu0 0.0
  %104 = vmatpush.msra.mxu0 0.0
  %105 = vmatpush.msra.mxu0 0.0
  %106 = vmatpush.msra.mxu0 0.0
  %107 = vmatpush.msra.mxu0 0.0
  %108 = vmatpush.msra.mxu0 %v36
  %109 = vmatpush.msra.mxu0 %v35
  %110 = vmatpush.msra.mxu0 %v34
  %111 = vmatpush.msra.mxu0 %v33
  %112 = vmatmul.f32.gmra.mxu0 %v94
  %v113 = vpop.f32.mrf.mxu0
  %v114 = vadd.f32 0.0, %v113
  %115 = vdwg.mxu0
  %v116 = vadd.f32 %v49, %v114
  %v117 = vxor.u32 %v116, 2147483648
  %v118 = vmul.f32 %v117, 1.442695
  %v119 = vpow.pop %v118
  %v120 = vadd.f32 %v119, 1.0
  %v121 = vrcp.pop %v120
  %v122 = vmul.f32 %v120, %v121
  %v123 = vsub.f32 1.0, %v122
  %v124 = vmul.f32 %v121, %v123
  %v125 = vadd.f32 %v121, %v124
  %vm126 = vweird.f32 %v120
  %vm127 = vweird.f32 %v121
  %vm128 = vmor %vm126, %vm127
  %v129 = vsel %vm128, %v121, %v125
  %v130 = vand.u32 2147483647, %v120
  %vm131 = vcmp.eq.f32.partialorder %v130, 8.507059e+37
  %v132 = vand.u32 %v120, 2147483648
  %v133 = vor.u32 1.1754944e-38, %v132
  %v134 = vsel %vm131, %v133, %v129
  %v135 = vmul.f32 1.0, %v134
  %v136 = vtanh.pop %v116
  %v137 = vmul.f32 %v135, 0.0
  %139 = vrot.lane.b32.xlu0 %v136, 64
  %v140 = vpop.permute.xlu0 %139
  %v142 = vmul.f32 %v135, %v140
  %144 = vrot.lane.b32.xlu0 %v142, 32
  %v145 = vpop.permute.xlu0 %144
  %v147 = vadd.f32 %v137, %v145
  %v148 = vtanh.pop %v147
  %150 = vrot.lane.b32.xlu0 %v148, 64
  %v151 = vpop.permute.xlu0 %150
  %v153 = vmul.f32 %v135, %v151
  %155 = vrot.lane.b32.xlu0 %v153, 32
  %v156 = vpop.permute.xlu0 %155
  %v157 = vsel %vm92, %v156, 0
  %159 = vmatpush.msra.mxu0 0.0
  %160 = vmatpush.msra.mxu0 0.0
  %161 = vmatpush.msra.mxu0 0.0
  %162 = vmatpush.msra.mxu0 0.0
  %163 = vmatpush.msra.mxu0 0.0
  %164 = vmatpush.msra.mxu0 0.0
  %165 = vmatpush.msra.mxu0 0.0
  %166 = vmatpush.msra.mxu0 0.0
  %167 = vmatpush.msra.mxu0 0.0
  %168 = vmatpush.msra.mxu0 0.0
  %169 = vmatpush.msra.mxu0 0.0
  %170 = vmatpush.msra.mxu0 0.0
  %171 = vmatpush.msra.mxu0 %v36
  %172 = vmatpush.msra.mxu0 %v35
  %173 = vmatpush.msra.mxu0 %v34
  %174 = vmatpush.msra.mxu0 %v33
  %175 = vmatmul.f32.gmra.mxu0 %v157
  %v176 = vpop.f32.mrf.mxu0
  %v177 = vadd.f32 0.0, %v176
  %178 = vdwg.mxu0
  %v179 = vadd.f32 %v55, %v177
  %v180 = vxor.u32 %v179, 2147483648
  %v181 = vmul.f32 %v180, 1.442695
  %v182 = vpow.pop %v181
  %v183 = vadd.f32 %v182, 1.0
  %v184 = vrcp.pop %v183
  %v185 = vmul.f32 %v183, %v184
  %v186 = vsub.f32 1.0, %v185
  %v187 = vmul.f32 %v184, %v186
  %v188 = vadd.f32 %v184, %v187
  %vm189 = vweird.f32 %v183
  %vm190 = vweird.f32 %v184
  %vm191 = vmor %vm189, %vm190
  %v192 = vsel %vm191, %v184, %v188
  %v193 = vand.u32 2147483647, %v183
  %vm194 = vcmp.eq.f32.partialorder %v193, 8.507059e+37
  %v195 = vand.u32 %v183, 2147483648
  %v196 = vor.u32 1.1754944e-38, %v195
  %v197 = vsel %vm194, %v196, %v192
  %v198 = vmul.f32 1.0, %v197
  %v199 = vtanh.pop %v179
  %v200 = vmul.f32 %v198, %v147
  %202 = vrot.lane.b32.xlu0 %v199, 64
  %v203 = vpop.permute.xlu0 %202
  %v205 = vmul.f32 %v198, %v203
  %207 = vrot.lane.b32.xlu0 %v205, 32
  %v208 = vpop.permute.xlu0 %207
  %v210 = vadd.f32 %v200, %v208
  %v211 = vtanh.pop %v210
  %213 = vrot.lane.b32.xlu0 %v211, 64
  %v214 = vpop.permute.xlu0 %213
  %v216 = vmul.f32 %v198, %v214
  %218 = vrot.lane.b32.xlu0 %v216, 32
  %v219 = vpop.permute.xlu0 %218
  %v220 = vsel %vm92, %v219, 0
  %222 = vmatpush.msra.mxu0 0.0
  %223 = vmatpush.msra.mxu0 0.0
  %224 = vmatpush.msra.mxu0 0.0
  %225 = vmatpush.msra.mxu0 0.0
  %226 = vmatpush.msra.mxu0 0.0
  %227 = vmatpush.msra.mxu0 0.0
  %228 = vmatpush.msra.mxu0 0.0
  %229 = vmatpush.msra.mxu0 0.0
  %230 = vmatpush.msra.mxu0 0.0
  %231 = vmatpush.msra.mxu0 0.0
  %232 = vmatpush.msra.mxu0 0.0
  %233 = vmatpush.msra.mxu0 0.0
  %234 = vmatpush.msra.mxu0 %v36
  %235 = vmatpush.msra.mxu0 %v35
  %236 = vmatpush.msra.mxu0 %v34
  %237 = vmatpush.msra.mxu0 %v33
  %238 = vmatmul.f32.gmra.mxu0 %v220
  %v239 = vpop.f32.mrf.mxu0
  %v240 = vadd.f32 0.0, %v239
  %241 = vdwg.mxu0
  %v242 = vadd.f32 %v61, %v240
  %v243 = vxor.u32 %v242, 2147483648
  %v244 = vmul.f32 %v243, 1.442695
  %v245 = vpow.pop %v244
  %v246 = vadd.f32 %v245, 1.0
  %v247 = vrcp.pop %v246
  %v248 = vmul.f32 %v246, %v247
  %v249 = vsub.f32 1.0, %v248
  %v250 = vmul.f32 %v247, %v249
  %v251 = vadd.f32 %v247, %v250
  %vm252 = vweird.f32 %v246
  %vm253 = vweird.f32 %v247
  %vm254 = vmor %vm252, %vm253
  %v255 = vsel %vm254, %v247, %v251
  %v256 = vand.u32 2147483647, %v246
  %vm257 = vcmp.eq.f32.partialorder %v256, 8.507059e+37
  %v258 = vand.u32 %v246, 2147483648
  %v259 = vor.u32 1.1754944e-38, %v258
  %v260 = vsel %vm257, %v259, %v255
  %v261 = vmul.f32 1.0, %v260
  %v262 = vtanh.pop %v242
  %v263 = vmul.f32 %v261, %v210
  %265 = vrot.lane.b32.xlu0 %v262, 64
  %v266 = vpop.permute.xlu0 %265
  %v268 = vmul.f32 %v261, %v266
  %270 = vrot.lane.b32.xlu0 %v268, 32
  %v271 = vpop.permute.xlu0 %270
  %v273 = vadd.f32 %v263, %v271
  %v274 = vtanh.pop %v273
  %276 = vrot.lane.b32.xlu0 %v274, 64
  %v277 = vpop.permute.xlu0 %276
  %v279 = vmul.f32 %v261, %v277
  %281 = vrot.lane.b32.xlu0 %v279, 32
  %v282 = vpop.permute.xlu0 %281
  %v283 = vsel %vm92, %v282, 0
  %285 = vmatpush.msra.mxu0 0.0
  %286 = vmatpush.msra.mxu0 0.0
  %287 = vmatpush.msra.mxu0 0.0
  %288 = vmatpush.msra.mxu0 0.0
  %289 = vmatpush.msra.mxu0 0.0
  %290 = vmatpush.msra.mxu0 0.0
  %291 = vmatpush.msra.mxu0 0.0
  %292 = vmatpush.msra.mxu0 0.0
  %293 = vmatpush.msra.mxu0 0.0
  %294 = vmatpush.msra.mxu0 0.0
  %295 = vmatpush.msra.mxu0 0.0
  %296 = vmatpush.msra.mxu0 0.0
  %297 = vmatpush.msra.mxu0 %v36
  %298 = vmatpush.msra.mxu0 %v35
  %299 = vmatpush.msra.mxu0 %v34
  %300 = vmatpush.msra.mxu0 %v33
  %301 = vmatmul.f32.gmra.mxu0 %v283
  %v302 = vpop.f32.mrf.mxu0
  %v303 = vadd.f32 0.0, %v302
  %304 = vdwg.mxu0
  %v305 = vadd.f32 %v67, %v303
  %v306 = vxor.u32 %v305, 2147483648
  %v307 = vmul.f32 %v306, 1.442695
  %v308 = vpow.pop %v307
  %v309 = vadd.f32 %v308, 1.0
  %v310 = vrcp.pop %v309
  %v311 = vmul.f32 %v309, %v310
  %v312 = vsub.f32 1.0, %v311
  %v313 = vmul.f32 %v310, %v312
  %v314 = vadd.f32 %v310, %v313
  %vm315 = vweird.f32 %v309
  %vm316 = vweird.f32 %v310
  %vm317 = vmor %vm315, %vm316
  %v318 = vsel %vm317, %v310, %v314
  %v319 = vand.u32 2147483647, %v309
  %vm320 = vcmp.eq.f32.partialorder %v319, 8.507059e+37
  %v321 = vand.u32 %v309, 2147483648
  %v322 = vor.u32 1.1754944e-38, %v321
  %v323 = vsel %vm320, %v322, %v318
  %v324 = vmul.f32 1.0, %v323
  %v325 = vtanh.pop %v305
  %v326 = vmul.f32 %v324, %v273
  %328 = vrot.lane.b32.xlu0 %v325, 64
  %v329 = vpop.permute.xlu0 %328
  %v331 = vmul.f32 %v324, %v329
  %333 = vrot.lane.b32.xlu0 %v331, 32
  %v334 = vpop.permute.xlu0 %333
  %v336 = vadd.f32 %v326, %v334
  %v337 = vtanh.pop %v336
  %339 = vrot.lane.b32.xlu0 %v337, 64
  %v340 = vpop.permute.xlu0 %339
  %v342 = vmul.f32 %v324, %v340
  %344 = vrot.lane.b32.xlu0 %v342, 32
  %v345 = vpop.permute.xlu0 %344
  %v346 = vsel %vm92, %v345, 0
  %348 = vmatpush.msra.mxu0 0.0
  %349 = vmatpush.msra.mxu0 0.0
  %350 = vmatpush.msra.mxu0 0.0
  %351 = vmatpush.msra.mxu0 0.0
  %352 = vmatpush.msra.mxu0 0.0
  %353 = vmatpush.msra.mxu0 0.0
  %354 = vmatpush.msra.mxu0 0.0
  %355 = vmatpush.msra.mxu0 0.0
  %356 = vmatpush.msra.mxu0 0.0
  %357 = vmatpush.msra.mxu0 0.0
  %358 = vmatpush.msra.mxu0 0.0
  %359 = vmatpush.msra.mxu0 0.0
  %360 = vmatpush.msra.mxu0 %v36
  %361 = vmatpush.msra.mxu0 %v35
  %362 = vmatpush.msra.mxu0 %v34
  %363 = vmatpush.msra.mxu0 %v33
  %364 = vmatmul.f32.gmra.mxu0 %v346
  %v365 = vpop.f32.mrf.mxu0
  %v366 = vadd.f32 0.0, %v365
  %367 = vdwg.mxu0
  %v368 = vadd.f32 %v73, %v366
  %v369 = vxor.u32 %v368, 2147483648
  %v370 = vmul.f32 %v369, 1.442695
  %v371 = vpow.pop %v370
  %v372 = vadd.f32 %v371, 1.0
  %v373 = vrcp.pop %v372
  %v374 = vmul.f32 %v372, %v373
  %v375 = vsub.f32 1.0, %v374
  %v376 = vmul.f32 %v373, %v375
  %v377 = vadd.f32 %v373, %v376
  %vm378 = vweird.f32 %v372
  %vm379 = vweird.f32 %v373
  %vm380 = vmor %vm378, %vm379
  %v381 = vsel %vm380, %v373, %v377
  %v382 = vand.u32 2147483647, %v372
  %vm383 = vcmp.eq.f32.partialorder %v382, 8.507059e+37
  %v384 = vand.u32 %v372, 2147483648
  %v385 = vor.u32 1.1754944e-38, %v384
  %v386 = vsel %vm383, %v385, %v381
  %v387 = vmul.f32 1.0, %v386
  %v388 = vtanh.pop %v368
  %v389 = vmul.f32 %v387, %v336
  %391 = vrot.lane.b32.xlu0 %v388, 64
  %v392 = vpop.permute.xlu0 %391
  %v394 = vmul.f32 %v387, %v392
  %396 = vrot.lane.b32.xlu0 %v394, 32
  %v397 = vpop.permute.xlu0 %396
  %v399 = vadd.f32 %v389, %v397
  %v400 = vtanh.pop %v399
  %402 = vrot.lane.b32.xlu0 %v400, 64
  %v403 = vpop.permute.xlu0 %402
  %v405 = vmul.f32 %v387, %v403
  %407 = vrot.lane.b32.xlu0 %v405, 32
  %v408 = vpop.permute.xlu0 %407
  %v409 = vsel %vm92, %v408, 0
  %411 = vmatpush.msra.mxu0 0.0
  %412 = vmatpush.msra.mxu0 0.0
  %413 = vmatpush.msra.mxu0 0.0
  %414 = vmatpush.msra.mxu0 0.0
  %415 = vmatpush.msra.mxu0 0.0
  %416 = vmatpush.msra.mxu0 0.0
  %417 = vmatpush.msra.mxu0 0.0
  %418 = vmatpush.msra.mxu0 0.0
  %419 = vmatpush.msra.mxu0 0.0
  %420 = vmatpush.msra.mxu0 0.0
  %421 = vmatpush.msra.mxu0 0.0
  %422 = vmatpush.msra.mxu0 0.0
  %423 = vmatpush.msra.mxu0 %v36
  %424 = vmatpush.msra.mxu0 %v35
  %425 = vmatpush.msra.mxu0 %v34
  %426 = vmatpush.msra.mxu0 %v33
  %427 = vmatmul.f32.gmra.mxu0 %v409
  %v428 = vpop.f32.mrf.mxu0
  %v429 = vadd.f32 0.0, %v428
  %430 = vdwg.mxu0
  %v431 = vadd.f32 %v79, %v429
  %v432 = vxor.u32 %v431, 2147483648
  %v433 = vmul.f32 %v432, 1.442695
  %v434 = vpow.pop %v433
  %v435 = vadd.f32 %v434, 1.0
  %v436 = vrcp.pop %v435
  %v437 = vmul.f32 %v435, %v436
  %v438 = vsub.f32 1.0, %v437
  %v439 = vmul.f32 %v436, %v438
  %v440 = vadd.f32 %v436, %v439
  %vm441 = vweird.f32 %v435
  %vm442 = vweird.f32 %v436
  %vm443 = vmor %vm441, %vm442
  %v444 = vsel %vm443, %v436, %v440
  %v445 = vand.u32 2147483647, %v435
  %vm446 = vcmp.eq.f32.partialorder %v445, 8.507059e+37
  %v447 = vand.u32 %v435, 2147483648
  %v448 = vor.u32 1.1754944e-38, %v447
  %v449 = vsel %vm446, %v448, %v444
  %v450 = vmul.f32 1.0, %v449
  %v451 = vtanh.pop %v431
  %v452 = vmul.f32 %v450, %v399
  %454 = vrot.lane.b32.xlu0 %v451, 64
  %v455 = vpop.permute.xlu0 %454
  %v457 = vmul.f32 %v450, %v455
  %459 = vrot.lane.b32.xlu0 %v457, 32
  %v460 = vpop.permute.xlu0 %459
  %v462 = vadd.f32 %v452, %v460
  %v463 = vtanh.pop %v462
  %465 = vrot.lane.b32.xlu0 %v463, 64
  %v466 = vpop.permute.xlu0 %465
  %v468 = vmul.f32 %v450, %v466
  %470 = vrot.lane.b32.xlu0 %v468, 32
  %v471 = vpop.permute.xlu0 %470
  %v472 = vsel %vm92, %v471, 0
  %474 = vmatpush.msra.mxu0 0.0
  %475 = vmatpush.msra.mxu0 0.0
  %476 = vmatpush.msra.mxu0 0.0
  %477 = vmatpush.msra.mxu0 0.0
  %478 = vmatpush.msra.mxu0 0.0
  %479 = vmatpush.msra.mxu0 0.0
  %480 = vmatpush.msra.mxu0 0.0
  %481 = vmatpush.msra.mxu0 0.0
  %482 = vmatpush.msra.mxu0 0.0
  %483 = vmatpush.msra.mxu0 0.0
  %484 = vmatpush.msra.mxu0 0.0
  %485 = vmatpush.msra.mxu0 0.0
  %486 = vmatpush.msra.mxu0 %v36
  %487 = vmatpush.msra.mxu0 %v35
  %488 = vmatpush.msra.mxu0 %v34
  %489 = vmatpush.msra.mxu0 %v33
  %490 = vmatmul.f32.gmra.mxu0 %v472
  %v491 = vpop.f32.mrf.mxu0
  %v492 = vadd.f32 0.0, %v491
  %493 = vdwg.mxu0
  %v494 = vadd.f32 %v85, %v492
  %v495 = vxor.u32 %v494, 2147483648
  %v496 = vmul.f32 %v495, 1.442695
  %v497 = vpow.pop %v496
  %v498 = vadd.f32 %v497, 1.0
  %v499 = vrcp.pop %v498
  %v500 = vmul.f32 %v498, %v499
  %v501 = vsub.f32 1.0, %v500
  %v502 = vmul.f32 %v499, %v501
  %v503 = vadd.f32 %v499, %v502
  %vm504 = vweird.f32 %v498
  %vm505 = vweird.f32 %v499
  %vm506 = vmor %vm504, %vm505
  %v507 = vsel %vm506, %v499, %v503
  %v508 = vand.u32 2147483647, %v498
  %vm509 = vcmp.eq.f32.partialorder %v508, 8.507059e+37
  %v510 = vand.u32 %v498, 2147483648
  %v511 = vor.u32 1.1754944e-38, %v510
  %v512 = vsel %vm509, %v511, %v507
  %v513 = vmul.f32 1.0, %v512
  %v514 = vtanh.pop %v494
  %v515 = vmul.f32 %v513, %v462
  %517 = vrot.lane.b32.xlu0 %v514, 64
  %v518 = vpop.permute.xlu0 %517
  %v520 = vmul.f32 %v513, %v518
  %522 = vrot.lane.b32.xlu0 %v520, 32
  %v523 = vpop.permute.xlu0 %522
  %v525 = vadd.f32 %v515, %v523
  %v526 = vtanh.pop %v525
  %528 = vrot.lane.b32.xlu0 %v526, 64
  %v529 = vpop.permute.xlu0 %528
  %v531 = vmul.f32 %v513, %v529
  %533 = vrot.lane.b32.xlu0 %v531, 32
  %v534 = vpop.permute.xlu0 %533
  %v535 = vsel %vm92, %v534, 0
  %537 = vmatpush.msra.mxu0 0.0
  %538 = vmatpush.msra.mxu0 0.0
  %539 = vmatpush.msra.mxu0 0.0
  %540 = vmatpush.msra.mxu0 0.0
  %541 = vmatpush.msra.mxu0 0.0
  %542 = vmatpush.msra.mxu0 0.0
  %543 = vmatpush.msra.mxu0 0.0
  %544 = vmatpush.msra.mxu0 0.0
  %545 = vmatpush.msra.mxu0 0.0
  %546 = vmatpush.msra.mxu0 0.0
  %547 = vmatpush.msra.mxu0 0.0
  %548 = vmatpush.msra.mxu0 0.0
  %549 = vmatpush.msra.mxu0 %v36
  %550 = vmatpush.msra.mxu0 %v35
  %551 = vmatpush.msra.mxu0 %v34
  %552 = vmatpush.msra.mxu0 %v33
  %553 = vmatmul.f32.gmra.mxu0 %v535
  %v554 = vpop.f32.mrf.mxu0
  %v555 = vadd.f32 0.0, %v554
  %556 = vdwg.mxu0
  %v557 = vadd.f32 %v91, %v555
  %v558 = vxor.u32 %v557, 2147483648
  %v559 = vmul.f32 %v558, 1.442695
  %v560 = vpow.pop %v559
  %v561 = vadd.f32 %v560, 1.0
  %v562 = vrcp.pop %v561
  %v563 = vmul.f32 %v561, %v562
  %v564 = vsub.f32 1.0, %v563
  %v565 = vmul.f32 %v562, %v564
  %v566 = vadd.f32 %v562, %v565
  %vm567 = vweird.f32 %v561
  %vm568 = vweird.f32 %v562
  %vm569 = vmor %vm567, %vm568
  %v570 = vsel %vm569, %v562, %v566
  %v571 = vand.u32 2147483647, %v561
  %vm572 = vcmp.eq.f32.partialorder %v571, 8.507059e+37
  %v573 = vand.u32 %v561, 2147483648
  %v574 = vor.u32 1.1754944e-38, %v573
  %v575 = vsel %vm572, %v574, %v570
  %v576 = vmul.f32 1.0, %v575
  %v577 = vtanh.pop %v557
  %v578 = vmul.f32 %v576, %v525
  %580 = vrot.lane.b32.xlu0 %v577, 64
  %v581 = vpop.permute.xlu0 %580
  %v583 = vmul.f32 %v576, %v581
  %585 = vrot.lane.b32.xlu0 %v583, 32
  %v586 = vpop.permute.xlu0 %585
  %v588 = vadd.f32 %v578, %v586
  %v589 = vtanh.pop %v588
  %591 = vrot.lane.b32.xlu0 %v589, 64
  %v592 = vpop.permute.xlu0 %591
  %v594 = vmul.f32 %v576, %v592
  %v595 = vld [vmem:[%s4] sm:$0x1]
  %v597 = vperm.slane %v595, 0
  %v599 = vmul.f32 %v88, %v597
  %v600 = vld [vmem:[%s5] sm:$0x1]
  %v602 = vperm.slane %v600, 0
  %v604 = vadd.f32 %v599, %v602
  %v605 = vxor.u32 %v604, 2147483648
  %v606 = vmul.f32 %v605, 1.442695
  %v607 = vpow.pop %v606
  %v608 = vadd.f32 %v607, 1.0
  %v609 = vrcp.pop %v608
  %v610 = vmul.f32 %v608, %v609
  %v611 = vsub.f32 1.0, %v610
  %v612 = vmul.f32 %v609, %v611
  %v613 = vadd.f32 %v609, %v612
  %vm614 = vweird.f32 %v608
  %vm615 = vweird.f32 %v609
  %vm616 = vmor %vm614, %vm615
  %v617 = vsel %vm616, %v609, %v613
  %v618 = vand.u32 2147483647, %v608
  %vm619 = vcmp.eq.f32.partialorder %v618, 8.507059e+37
  %v620 = vand.u32 %v608, 2147483648
  %v621 = vor.u32 1.1754944e-38, %v620
  %v622 = vsel %vm619, %v621, %v617
  %v623 = vmul.f32 1.0, %v622
  %v624 = vtanh.pop %v604
  %626 = vrot.lane.b32.xlu0 %v624, 64
  %v627 = vpop.permute.xlu0 %626
  %v629 = vmul.f32 %v623, %v627
  %v630 = vtanh.pop %v629
  %632 = vrot.lane.b32.xlu0 %v630, 96
  %v633 = vpop.permute.xlu0 %632
  %v635 = vmul.f32 %v623, %v633
  %v636 = vld [vmem:[%s6] sm:$0xff]
  %v637 = vld [vmem:[%s6 + $0x8] sm:$0xff]
  %v638 = vld [vmem:[%s6 + $0x10] sm:$0xff]
  %v639 = vld [vmem:[%s6 + $0x18] sm:$0xff]
  %v640 = vld [vmem:[%s6 + $0x20] sm:$0xff]
  %v641 = vld [vmem:[%s6 + $0x28] sm:$0xff]
  %v642 = vld [vmem:[%s6 + $0x30] sm:$0xff]
  %v643 = vld [vmem:[%s6 + $0x38] sm:$0xff]
  %645 = vrot.lane.b32.xlu0 %v635, 32
  %v646 = vpop.permute.xlu0 %645
  %v647 = vsel %vm92, %v646, 0
  %649 = vmatpush.msra.mxu0 0.0
  %650 = vmatpush.msra.mxu0 0.0
  %651 = vmatpush.msra.mxu0 0.0
  %652 = vmatpush.msra.mxu0 0.0
  %653 = vmatpush.msra.mxu0 0.0
  %654 = vmatpush.msra.mxu0 0.0
  %655 = vmatpush.msra.mxu0 0.0
  %656 = vmatpush.msra.mxu0 0.0
  %657 = vmatpush.msra.mxu0 0.0
  %658 = vmatpush.msra.mxu0 0.0
  %659 = vmatpush.msra.mxu0 0.0
  %660 = vmatpush.msra.mxu0 0.0
  %661 = vmatpush.msra.mxu0 %v643
  %662 = vmatpush.msra.mxu0 %v642
  %663 = vmatpush.msra.mxu0 %v641
  %664 = vmatpush.msra.mxu0 %v640
  %665 = vmatmul.f32.gmra.mxu0 %v647
  %v666 = vpop.f32.mrf.mxu0
  %v667 = vadd.f32 0.0, %v666
  %668 = vdwg.mxu0
  %670 = vrot.lane.b32.xlu0 %v594, 32
  %v671 = vpop.permute.xlu0 %670
  %v672 = vsel %vm92, %v671, 0
  %674 = vmatpush.msra.mxu0 0.0
  %675 = vmatpush.msra.mxu0 0.0
  %676 = vmatpush.msra.mxu0 0.0
  %677 = vmatpush.msra.mxu0 0.0
  %678 = vmatpush.msra.mxu0 0.0
  %679 = vmatpush.msra.mxu0 0.0
  %680 = vmatpush.msra.mxu0 0.0
  %681 = vmatpush.msra.mxu0 0.0
  %682 = vmatpush.msra.mxu0 0.0
  %683 = vmatpush.msra.mxu0 0.0
  %684 = vmatpush.msra.mxu0 0.0
  %685 = vmatpush.msra.mxu0 0.0
  %686 = vmatpush.msra.mxu0 %v639
  %687 = vmatpush.msra.mxu0 %v638
  %688 = vmatpush.msra.mxu0 %v637
  %689 = vmatpush.msra.mxu0 %v636
  %690 = vmatmul.f32.gmra.mxu0 %v672
  %v691 = vpop.f32.mrf.mxu0
  %v692 = vadd.f32 %v667, %v691
  %693 = vdwg.mxu0
  %v694 = vld [vmem:[%s7] sm:$0x1]
  %v696 = vperm.slane %v694, 0
  %v698 = vadd.f32 %v692, %v696
  %vm699 = vcmask 31744
  %700 = vst.msk [vmem:[%s8] sm:$0xff] %vm699, %v698
  // Predicated region
  $region34: #{rnn_forward.1} parent=0 // pred_check
    _
  $region35: #{rnn_forward.1} parent=0 // pred_check_branch
    %702 = sbr.rel (0) target = $region37
  $region36: #{rnn_forward.1} parent=0 // pred_region
    _
  $region37: #{rnn_forward.1} parent=0 // pred_fallthru
    _
  // Predicated region
  $region38: #{rnn_forward.1} parent=0 // pred_check
    _
  $region39: #{rnn_forward.1} parent=0 // pred_check_branch
    %704 = sbr.rel (0) target = $region41
  $region40: #{rnn_forward.1} parent=0 // pred_region
    _
  $region41: #{rnn_forward.1} parent=0 // pred_fallthru
    _

</llo_original>
